<compile_context>
chip_gen: v7x
topology: tpu7x:2x2x1
jax: 0.10.0
libtpu: 0.0.40
codegen_flags: <defaults>
</compile_context>

<pallas_src>
import functools

import jax
import jax.numpy as jnp
from jax.experimental import pallas as pl
from jax.experimental.pallas import tpu as pltpu


def _round_up(x, m):
    return ((x + m - 1) // m) * m


def char_encoder_kernel(ids_ref, tblg_ref, word_ref, wlinh_ref, out_ref, *,
                        hidden_dim, stream_words, act_dtype):
    """One grid step = TN characters, laid out along the 128-lane axis."""
    H = hidden_dim
    mm_dtype = tblg_ref.dtype
    TN = out_ref.shape[1]
    Vp = tblg_ref.shape[1]

    ids = ids_ref[...]                                      # (2, TN) int32
    cidx = ids[0:1, :]                                      # (1, TN) char index

    # Embedding lookup fused with the LSTM input projection (+bias):
    # a single MXU pass against the (3H, V) table.
    ch_onehot = (jax.lax.broadcasted_iota(jnp.int32, (Vp, TN), 0)
                 == cidx).astype(mm_dtype)                  # (V, TN)
    gates = jnp.dot(tblg_ref[...], ch_onehot,
                    preferred_element_type=jnp.float32)     # (3H, TN) f32

    # Word half of the Linear (output bias already folded in).
    if stream_words:
        wl = word_ref[...].astype(jnp.float32)              # (W, TN) pre-gathered
    else:
        NWp = word_ref.shape[1]
        wid = ids[1:2, :]                                   # (1, TN) word index
        wd_onehot = (jax.lax.broadcasted_iota(jnp.int32, (NWp, TN), 0)
                     == wid).astype(mm_dtype)               # (NW, TN)
        wl = jnp.dot(word_ref[...], wd_onehot,
                     preferred_element_type=jnp.float32)    # (W, TN)

    # Gate row layout (set by the wrapper): [0.5*i | g | 0.5*o], H rows each.
    # sigmoid(z) = 0.5*tanh(z/2) + 0.5, so one tanh pass over 3H rows yields
    # every gate activation; sublane slices at 0/H/2H are vreg-aligned.
    t = jnp.tanh(gates.astype(act_dtype))                   # (3H, TN)
    half = jnp.asarray(0.5, act_dtype)
    s_i = t[0:H] * half + half                              # sigmoid(z_i)
    g_t = t[H:2 * H]                                        # tanh(z_g)
    s_o = t[2 * H:3 * H] * half + half                      # sigmoid(z_o)
    h = s_o * jnp.tanh(s_i * g_t)                           # (H, TN) LSTM hidden

    # h half of the Linear, then ReLU.  Output stays char-major, so the store
    # is fully lane-dense (TN lanes) with no masked partial stores.
    y = wl + jnp.dot(wlinh_ref[...], h.astype(mm_dtype),
                     preferred_element_type=jnp.float32)    # (W, TN)
    out_ref[...] = jnp.maximum(y, 0.0).astype(out_ref.dtype)


def char_level_encoder(char_idx, word_ids, word_embs, embed_tbl,
                       w_ih, b_ih, b_hh, w_lin, b_lin, *,
                       tile_n=1024, matmul_dtype=jnp.bfloat16,
                       act_dtype=jnp.float32, word_gather="auto"):
    """Returns (N, W) char-level embeddings, one row per character.

    char_idx : (N,)  int   character-table index of every char in the batch
    word_ids : (N,)  int   which word each character belongs to
    word_embs: (num_words, W) f32 de-duplicated word embeddings
    """
    N = int(char_idx.shape[0])
    NW, W = word_embs.shape
    H = w_ih.shape[0] // 4
    f32 = jnp.float32

    if word_gather == "auto":
        # Large resident word tables waste VMEM (worst on v7x's 64 MiB) and
        # cost O(N*NW) one-hot work; stream pre-gathered rows instead.
        word_gather = "onehot" if NW <= 1024 else "stream"
    stream_words = word_gather == "stream"

    # ---- wrapper-side parameter prep (tiny, plain XLA) -----------------------
    b = jnp.asarray(b_ih, f32) + jnp.asarray(b_hh, f32)             # (4H,)
    w_ih = jnp.asarray(w_ih, f32)
    w_lin = jnp.asarray(w_lin, f32)
    w_i, w_g, w_o = w_ih[0:H], w_ih[2 * H:3 * H], w_ih[3 * H:4 * H]
    b_i, b_g, b_o = b[0:H], b[2 * H:3 * H], b[3 * H:4 * H]
    # Row layout [0.5*i | g | 0.5*o]: the 0.5 pre-scale lets the kernel build
    # sigmoid from a single tanh pass; the forget gate is dead (c0 == 0).
    w_stk = jnp.concatenate([0.5 * w_i, w_g, 0.5 * w_o], axis=0)    # (3H, E)
    b_stk = jnp.concatenate([0.5 * b_i, b_g, 0.5 * b_o], axis=0)    # (3H,)
    # Fused char-embedding-lookup + LSTM input projection table, char-major.
    tblg_T = (jnp.asarray(embed_tbl, f32) @ w_stk.T + b_stk).T      # (3H, V)
    # Per-word half of the Linear, output bias folded in.
    word_lin = (jnp.asarray(word_embs, f32) @ w_lin[:, :W].T
                + jnp.asarray(b_lin, f32))                          # (NW, W)
    wlinh = w_lin[:, W:]                                            # (W, H)

    # ---- char-axis tiling (characters live on the 128-lane axis) -------------
    cdiv4 = -(-N // 4)                 # aim for >= 4 grid steps (2 per TC on v7x)
    TN = max(128, min(_round_up(tile_n, 128), _round_up(cdiv4, 128)))
    N_pad = _round_up(N, TN)

    def pad_cols(x, cols):
        extra = cols - x.shape[-1]
        if extra == 0:
            return x
        return jnp.pad(x, [(0, 0)] * (x.ndim - 1) + [(0, extra)])

    # Packed (char_idx, word_id) int32 stream: one DMA, ~8 B/char, lane-dense.
    ids = jnp.stack([jnp.asarray(char_idx, jnp.int32),
                     jnp.asarray(word_ids, jnp.int32)], axis=0)     # (2, N)
    ids = pad_cols(ids, N_pad)

    tblg_op = tblg_T.astype(matmul_dtype)
    wlinh_op = wlinh.astype(matmul_dtype)
    if stream_words:
        # Pre-gathered word rows streamed lane-dense per tile.  Kept in f32 so
        # the word/bias half of the output loses no precision.
        word_op = pad_cols(word_lin[jnp.asarray(word_ids, jnp.int32)].T, N_pad)
        word_spec = pl.BlockSpec((W, TN), lambda i: (0, i))
    else:
        NW_pad = _round_up(NW, 8)
        word_op = pad_cols(word_lin.T, NW_pad).astype(matmul_dtype)  # (W, NW)
        word_spec = pl.BlockSpec((W, NW_pad), lambda i: (0, 0))

    grid = (N_pad // TN,)
    kernel = functools.partial(char_encoder_kernel, hidden_dim=H,
                               stream_words=stream_words, act_dtype=act_dtype)

    word_flops = 0 if stream_words else 2 * N_pad * word_op.shape[1] * W
    tbl_bytes = (tblg_op.size * tblg_op.dtype.itemsize
                 + wlinh_op.size * wlinh_op.dtype.itemsize
                 + word_op.size * word_op.dtype.itemsize)
    cost = pl.CostEstimate(
        flops=2 * N_pad * (tblg_op.shape[1] * 3 * H + H * W) + word_flops,
        transcendentals=4 * H * N_pad,
        bytes_accessed=ids.size * 4 + 4 * W * N_pad + tbl_bytes,
    )

    # TODO(synk): single-buffer the replicated (index_map == (0,0)) weight
    # blocks via pipeline_mode=pl.Buffered(1) once that path is verified on the
    # target jax version; their footprint here is tiny so it is not urgent.
    out_t = pl.pallas_call(
        kernel,
        out_shape=jax.ShapeDtypeStruct((W, N_pad), f32),
        grid=grid,
        in_specs=[
            pl.BlockSpec((2, TN), lambda i: (0, i)),         # packed char/word ids
            pl.BlockSpec(tblg_op.shape, lambda i: (0, 0)),   # fused gate table (3H,V)
            word_spec,                                       # word half of Linear
            pl.BlockSpec(wlinh_op.shape, lambda i: (0, 0)),  # h half of Linear (W,H)
        ],
        out_specs=pl.BlockSpec((W, TN), lambda i: (0, i)),
        compiler_params=pltpu.CompilerParams(
            dimension_semantics=("parallel",)),
        cost_estimate=cost,
    )(ids, tblg_op, word_op, wlinh_op)

    return out_t[:, :N].T                                    # (N, W)


def _reference(char_idx, word_emb_per_char, embed_tbl, w_ih, b_ih, b_hh,
               w_lin, b_lin):
    H = w_ih.shape[0] // 4
    x = embed_tbl[char_idx]                                   # (N, E)
    gates = x @ w_ih.T + (b_ih + b_hh)                        # (N, 4H)
    i_g = jax.nn.sigmoid(gates[:, 0:H])
    g_g = jnp.tanh(gates[:, 2 * H:3 * H])
    o_g = jax.nn.sigmoid(gates[:, 3 * H:4 * H])
    h = o_g * jnp.tanh(i_g * g_g)
    combined = jnp.concatenate([word_emb_per_char, h], axis=1)
    return jnp.maximum(combined @ w_lin.T + b_lin, 0.0)


if __name__ == "__main__":
    # Small config consistent with the module's __init__.
    word_embedding_dim = 32    # W
    char_embedding_dim = 16    # E
    hidden_dim = 32            # H
    num_embeddings = 40        # V (>= 36 Arabic chars + ' ' + '0')

    key = jax.random.PRNGKey(0)
    k = jax.random.split(key, 10)

    embed_tbl = jax.random.normal(k[0], (num_embeddings, char_embedding_dim), jnp.float32)
    w_ih = 0.2 * jax.random.normal(k[1], (4 * hidden_dim, char_embedding_dim), jnp.float32)
    b_ih = 0.1 * jax.random.normal(k[2], (4 * hidden_dim,), jnp.float32)
    b_hh = 0.1 * jax.random.normal(k[3], (4 * hidden_dim,), jnp.float32)
    # TODO(synk): lstm.weight_hh_l0 is unused (seq_len == 1, zero initial state).
    w_lin = 0.2 * jax.random.normal(
        k[4], (word_embedding_dim, word_embedding_dim + hidden_dim), jnp.float32)
    b_lin = 0.1 * jax.random.normal(k[5], (word_embedding_dim,), jnp.float32)

    # --- tiny sentence: 2 words of lengths (5, 3) -> N = 8 chars --------------
    word_lens = (5, 3)
    N = sum(word_lens)
    char_idx = jax.random.randint(k[6], (N,), 0, num_embeddings, jnp.int32)
    word_embs = jax.random.normal(k[7], (len(word_lens), word_embedding_dim), jnp.float32)
    word_ids = jnp.concatenate(
        [jnp.full((L,), i, jnp.int32) for i, L in enumerate(word_lens)])

    out = char_level_encoder(char_idx, word_ids, word_embs, embed_tbl,
                             w_ih, b_ih, b_hh, w_lin, b_lin,
                             matmul_dtype=jnp.float32)
    out = jax.block_until_ready(out)
    ref = _reference(char_idx, word_embs[word_ids], embed_tbl,
                     w_ih, b_ih, b_hh, w_lin, b_lin)
    assert out.shape == (N, word_embedding_dim)
    assert jnp.allclose(out, ref, atol=1e-4, rtol=1e-4), "f32 mismatch vs reference"

    # --- larger batch: multi-step ("parallel") grid path ----------------------
    n_words = 64
    lens = jax.random.randint(k[8], (n_words,), 2, 9, jnp.int32)
    Nb = int(lens.sum())
    word_ids_b = jnp.repeat(jnp.arange(n_words, dtype=jnp.int32), lens,
                            total_repeat_length=Nb)
    char_idx_b = jax.random.randint(k[9], (Nb,), 0, num_embeddings, jnp.int32)
    word_embs_b = jax.random.normal(k[7], (n_words, word_embedding_dim), jnp.float32)
    ref_b = _reference(char_idx_b, word_embs_b[word_ids_b], embed_tbl,
                       w_ih, b_ih, b_hh, w_lin, b_lin)

    # f32 everything, in-kernel one-hot word gather.
    out_f32 = jax.block_until_ready(char_level_encoder(
        char_idx_b, word_ids_b, word_embs_b, embed_tbl, w_ih, b_ih, b_hh,
        w_lin, b_lin, matmul_dtype=jnp.float32))
    assert out_f32.shape == (Nb, word_embedding_dim)
    assert jnp.allclose(out_f32, ref_b, atol=1e-4, rtol=1e-4), "tiled f32 mismatch"

    # Streamed pre-gathered word rows (large-NW path), f32.
    out_stream = jax.block_until_ready(char_level_encoder(
        char_idx_b, word_ids_b, word_embs_b, embed_tbl, w_ih, b_ih, b_hh,
        w_lin, b_lin, matmul_dtype=jnp.float32, word_gather="stream"))
    assert jnp.allclose(out_stream, ref_b, atol=1e-4, rtol=1e-4), "stream mismatch"

    # Default bf16 MXU operands (v6e/v7x friendly); activations stay f32.
    out_bf16 = jax.block_until_ready(char_level_encoder(
        char_idx_b, word_ids_b, word_embs_b, embed_tbl, w_ih, b_ih, b_hh,
        w_lin, b_lin))
    assert jnp.allclose(out_bf16, ref_b, atol=1e-1, rtol=5e-2), "bf16 mismatch"

    # Full bf16 (MXU operands + activation chain), for v6e/v7x.
    out_bf16a = jax.block_until_ready(char_level_encoder(
        char_idx_b, word_ids_b, word_embs_b, embed_tbl, w_ih, b_ih, b_hh,
        w_lin, b_lin, act_dtype=jnp.bfloat16))
    assert jnp.allclose(out_bf16a, ref_b, atol=1e-1, rtol=5e-2), "bf16-act mismatch"

    print("KERNEL_OK")
</pallas_src>

<mosaic_0001>
module attributes {stable_mosaic.version = 11 : i64} {
  func.func @char_encoder_kernel(%arg0: i32, %arg1: memref<2x128xi32, #tpu.memory_space<vmem>>, %arg2: memref<96x40xf32, #tpu.memory_space<vmem>>, %arg3: memref<32x8xf32, #tpu.memory_space<vmem>>, %arg4: memref<32x32xf32, #tpu.memory_space<vmem>>, %arg5: memref<32x128xf32, #tpu.memory_space<vmem>>) attributes {dimension_semantics = [#tpu.dimension_semantics<parallel>], iteration_bounds = array<i64: 1>, scalar_prefetch = 0 : i64, scratch_operands = 0 : i64, tpu.core_type = #tpu.core_type<tc>, window_params = [{transform_indices = @transform_0, window_bounds = array<i64: 2, 128>}, {pipeline_mode = #tpu.pipeline_mode<synchronous>, transform_indices = @transform_1, window_bounds = array<i64: 96, 40>}, {pipeline_mode = #tpu.pipeline_mode<synchronous>, transform_indices = @transform_2, window_bounds = array<i64: 32, 8>}, {pipeline_mode = #tpu.pipeline_mode<synchronous>, transform_indices = @transform_3, window_bounds = array<i64: 32, 32>}, {transform_indices = @transform_4, window_bounds = array<i64: 32, 128>}]} {
    %c0 = arith.constant 0 : index
    %c0_0 = arith.constant 0 : index
    %0 = vector.load %arg1[%c0, %c0_0] : memref<2x128xi32, #tpu.memory_space<vmem>>, vector<2x128xi32>
    %1 = vector.extract_strided_slice %0 {offsets = [0, 0], sizes = [1, 128], strides = [1, 1]} : vector<2x128xi32> to vector<1x128xi32>
    %2 = tpu.iota {dimensions = array<i32: 0>} : vector<40x128xi32>
    %3 = vector.broadcast %1 : vector<1x128xi32> to vector<40x128xi32>
    %4 = arith.cmpi eq, %2, %3 : vector<40x128xi32>
    %5 = arith.extui %4 : vector<40x128xi1> to vector<40x128xi32>
    %6 = arith.sitofp %5 : vector<40x128xi32> to vector<40x128xf32>
    %c0_1 = arith.constant 0 : index
    %c0_2 = arith.constant 0 : index
    %7 = vector.load %arg2[%c0_1, %c0_2] : memref<96x40xf32, #tpu.memory_space<vmem>>, vector<96x40xf32>
    %cst = arith.constant dense<0.000000e+00> : vector<96x128xf32>
    %8 = tpu.matmul %7, %6, %cst {dimension_numbers = #tpu.dot_dimension_numbers<[1], [0], [0], [1], [0, 0, 1, 1], [], []>} : vector<96x40xf32>, vector<40x128xf32>, vector<96x128xf32> -> vector<96x128xf32>
    %9 = vector.extract_strided_slice %0 {offsets = [1, 0], sizes = [1, 128], strides = [1, 1]} : vector<2x128xi32> to vector<1x128xi32>
    %10 = tpu.iota {dimensions = array<i32: 0>} : vector<8x128xi32>
    %11 = vector.broadcast %9 : vector<1x128xi32> to vector<8x128xi32>
    %12 = arith.cmpi eq, %10, %11 : vector<8x128xi32>
    %13 = arith.extui %12 : vector<8x128xi1> to vector<8x128xi32>
    %14 = arith.sitofp %13 : vector<8x128xi32> to vector<8x128xf32>
    %c0_3 = arith.constant 0 : index
    %c0_4 = arith.constant 0 : index
    %15 = vector.load %arg3[%c0_3, %c0_4] : memref<32x8xf32, #tpu.memory_space<vmem>>, vector<32x8xf32>
    %cst_5 = arith.constant dense<0.000000e+00> : vector<32x128xf32>
    %16 = tpu.matmul %15, %14, %cst_5 {dimension_numbers = #tpu.dot_dimension_numbers<[1], [0], [0], [1], [0, 0, 1, 1], [], []>} : vector<32x8xf32>, vector<8x128xf32>, vector<32x128xf32> -> vector<32x128xf32>
    %17 = math.tanh %8 : vector<96x128xf32>
    %18 = vector.extract_strided_slice %17 {offsets = [0, 0], sizes = [32, 128], strides = [1, 1]} : vector<96x128xf32> to vector<32x128xf32>
    %cst_6 = arith.constant 5.000000e-01 : f32
    %19 = vector.broadcast %cst_6 : f32 to vector<32x128xf32>
    %20 = arith.mulf %18, %19 : vector<32x128xf32>
    %cst_7 = arith.constant 5.000000e-01 : f32
    %21 = vector.broadcast %cst_7 : f32 to vector<32x128xf32>
    %22 = arith.addf %20, %21 : vector<32x128xf32>
    %23 = vector.extract_strided_slice %17 {offsets = [32, 0], sizes = [32, 128], strides = [1, 1]} : vector<96x128xf32> to vector<32x128xf32>
    %24 = vector.extract_strided_slice %17 {offsets = [64, 0], sizes = [32, 128], strides = [1, 1]} : vector<96x128xf32> to vector<32x128xf32>
    %cst_8 = arith.constant 5.000000e-01 : f32
    %25 = vector.broadcast %cst_8 : f32 to vector<32x128xf32>
    %26 = arith.mulf %24, %25 : vector<32x128xf32>
    %cst_9 = arith.constant 5.000000e-01 : f32
    %27 = vector.broadcast %cst_9 : f32 to vector<32x128xf32>
    %28 = arith.addf %26, %27 : vector<32x128xf32>
    %29 = arith.mulf %22, %23 : vector<32x128xf32>
    %30 = math.tanh %29 : vector<32x128xf32>
    %31 = arith.mulf %28, %30 : vector<32x128xf32>
    %c0_10 = arith.constant 0 : index
    %c0_11 = arith.constant 0 : index
    %32 = vector.load %arg4[%c0_10, %c0_11] : memref<32x32xf32, #tpu.memory_space<vmem>>, vector<32x32xf32>
    %cst_12 = arith.constant dense<0.000000e+00> : vector<32x128xf32>
    %33 = tpu.matmul %32, %31, %cst_12 {dimension_numbers = #tpu.dot_dimension_numbers<[1], [0], [0], [1], [0, 0, 1, 1], [], []>} : vector<32x32xf32>, vector<32x128xf32>, vector<32x128xf32> -> vector<32x128xf32>
    %34 = arith.addf %16, %33 : vector<32x128xf32>
    %cst_13 = arith.constant 0.000000e+00 : f32
    %35 = vector.broadcast %cst_13 : f32 to vector<32x128xf32>
    %36 = arith.maximumf %34, %35 : vector<32x128xf32>
    %c0_14 = arith.constant 0 : index
    %c0_15 = arith.constant 0 : index
    %37 = vector.load %arg5[%c0_14, %c0_15] : memref<32x128xf32, #tpu.memory_space<vmem>>, vector<32x128xf32>
    tpu.vector_store %arg5[%c0_14, %c0_15], %36 {strides = array<i32>} : memref<32x128xf32, #tpu.memory_space<vmem>>, vector<32x128xf32>,
    return
  }
  func.func @transform_0(%arg0: i32) -> (i32, i32) {
    %c0_i32 = arith.constant 0 : i32
    %c0_i32_0 = arith.constant 0 : i32
    return %c0_i32, %arg0 : i32, i32
  }
  func.func @transform_1(%arg0: i32) -> (i32, i32) {
    %c0_i32 = arith.constant 0 : i32
    %c0_i32_0 = arith.constant 0 : i32
    %c0_i32_1 = arith.constant 0 : i32
    return %c0_i32, %c0_i32_0 : i32, i32
  }
  func.func @transform_2(%arg0: i32) -> (i32, i32) {
    %c0_i32 = arith.constant 0 : i32
    %c0_i32_0 = arith.constant 0 : i32
    %c0_i32_1 = arith.constant 0 : i32
    return %c0_i32, %c0_i32_0 : i32, i32
  }
  func.func @transform_3(%arg0: i32) -> (i32, i32) {
    %c0_i32 = arith.constant 0 : i32
    %c0_i32_0 = arith.constant 0 : i32
    %c0_i32_1 = arith.constant 0 : i32
    return %c0_i32, %c0_i32_0 : i32, i32
  }
  func.func @transform_4(%arg0: i32) -> (i32, i32) {
    %c0_i32 = arith.constant 0 : i32
    %c0_i32_0 = arith.constant 0 : i32
    return %c0_i32, %arg0 : i32, i32
  }
}

</mosaic_0001>

<llo_original>
// kernel: tpu_custom_call.1
$region0: #{tpu_custom_call.1}
  #allocation0 [shape = 'u32[]', space=smem, size = 0x4, offset = 0x4, fixed_abs, tag = 'smem constant byte address 0x4 - core index']
  #allocation1 [shape = 'u32[144,128]{1,0:T(1,128)}', space=vmem, size = 0x12000, scoped, tag = 'internal scratch']
  %s0 = inlined_call_operand.vmem [shape: s32[2,128], index: 0, kind: input, shape index: {}]
  %s1 = inlined_call_operand.vmem [shape: f32[96,40], index: 1, kind: input, shape index: {}]
  %s2 = inlined_call_operand.vmem [shape: f32[32,8], index: 2, kind: input, shape index: {}]
  %s3 = inlined_call_operand.vmem [shape: f32[32,32], index: 3, kind: input, shape index: {}]
  %s4 = inlined_call_operand.hbm [shape: f32[32,128], index: 4, kind: output, shape index: {}]
  %s5 = sld [smem:[#allocation0]]
  $region26: #{tpu_custom_call.1} parent=0
    _
  %s7 = ssub.s32 1, %s5
  %s8 = scalar_select 0, %s7, %s5
  $region1: #{tpu_custom_call.1} parent=0
    #allocation2 [shape = 'u8[16384]{0}', space=vmem, size = 0x4000, scoped, tag = 'output window, operand 0, single buffered']
    #allocation3 [shape = 's32[1]{0}', space=sflag, size = 0x4, scoped, tag = 'scoped memory for tpu_custom_call.1']
    %9 = vsyncpa [#allocation3], 0
    // Predicated region
    $region2: #{tpu_custom_call.1} parent=1 // pred_check
      _
    $region3: #{tpu_custom_call.1} parent=1 // pred_check_branch
      %11 = sbr.rel (0) target = $region5
    $region4: #{tpu_custom_call.1} parent=1 // pred_region
      _
    $region5: #{tpu_custom_call.1} parent=1 // pred_fallthru
      _
    // Predicated region
    $region6: #{tpu_custom_call.1} parent=1 // pred_check
      _
    $region7: #{tpu_custom_call.1} parent=1 // pred_check_branch
      %13 = sbr.rel (0) target = $region9
    $region8: #{tpu_custom_call.1} parent=1 // pred_region
      _
    $region9: #{tpu_custom_call.1} parent=1 // pred_fallthru
      _
    // Predicated region
    $region10: #{tpu_custom_call.1} parent=1 // pred_check
      _
    $region11: #{tpu_custom_call.1} parent=1 // pred_check_branch
      %15 = sbr.rel (0) target = $region13
    $region12: #{tpu_custom_call.1} parent=1 // pred_region
      _
    $region13: #{tpu_custom_call.1} parent=1 // pred_fallthru
      _
    // Predicated region
    $region14: #{tpu_custom_call.1} parent=1 // pred_check
      _
    $region15: #{tpu_custom_call.1} parent=1 // pred_check_branch
      %17 = sbr.rel (0) target = $region17
    $region16: #{tpu_custom_call.1} parent=1 // pred_region
      _
    $region17: #{tpu_custom_call.1} parent=1 // pred_fallthru
      _
    %v18 = vld [vmem:[%s0] sm:$0x3]
    %v19 = vlaneseq
    %v20 = vshrl.u32 %v19, 7
    %v21 = vadd.s32 %v20, 8
    %v22 = vadd.s32 %v20, 16
    %v23 = vadd.s32 %v20, 24
    %v24 = vadd.s32 %v20, 32
    %v25 = vlaneseq
    %v26 = vshrl.u32 %v25, 7
    %v27 = vsub.s32 0, %v26
    %v28 = vrot.slane %v18, %v27
    %vm29 = vcmp.eq.s32.totalorder %v20, %v28
    %vm30 = vcmp.eq.s32.totalorder %v21, %v28
    %vm31 = vcmp.eq.s32.totalorder %v22, %v28
    %vm32 = vcmp.eq.s32.totalorder %v23, %v28
    %vm33 = vcmp.eq.s32.totalorder %v24, %v28
    %v34 = vsel %vm29, 1, 0
    %v35 = vsel %vm30, 1, 0
    %v36 = vsel %vm31, 1, 0
    %v37 = vsel %vm32, 1, 0
    %v38 = vsel %vm33, 1, 0
    %v39 = vcvt.s32.f32 %v34
    %v40 = vcvt.s32.f32 %v35
    %v41 = vcvt.s32.f32 %v36
    %v42 = vcvt.s32.f32 %v37
    %v43 = vcvt.s32.f32 %v38
    %v44 = vld [vmem:[%s1] sm:$0xff]
    %v45 = vld [vmem:[%s1 + $0x8] sm:$0xff]
    %v46 = vld [vmem:[%s1 + $0x10] sm:$0xff]
    %v47 = vld [vmem:[%s1 + $0x18] sm:$0xff]
    %v48 = vld [vmem:[%s1 + $0x20] sm:$0xff]
    %v49 = vld [vmem:[%s1 + $0x28] sm:$0xff]
    %v50 = vld [vmem:[%s1 + $0x30] sm:$0xff]
    %v51 = vld [vmem:[%s1 + $0x38] sm:$0xff]
    %v52 = vld [vmem:[%s1 + $0x40] sm:$0xff]
    %v53 = vld [vmem:[%s1 + $0x48] sm:$0xff]
    %v54 = vld [vmem:[%s1 + $0x50] sm:$0xff]
    %v55 = vld [vmem:[%s1 + $0x58] sm:$0xff]
    %vm56 = vcmask 326656
    %v58 = vsel %vm56, %v44, 0
    %v61 = vsel %vm56, %v45, 0
    %v64 = vsel %vm56, %v46, 0
    %v67 = vsel %vm56, %v47, 0
    %v70 = vsel %vm56, %v48, 0
    %v73 = vsel %vm56, %v49, 0
    %v76 = vsel %vm56, %v50, 0
    %v79 = vsel %vm56, %v51, 0
    %v82 = vsel %vm56, %v52, 0
    %v85 = vsel %vm56, %v53, 0
    %v88 = vsel %vm56, %v54, 0
    %v91 = vsel %vm56, %v55, 0
    %93 = vmatprep.subr.mxu0 0.0
    %94 = vmatpush1.msra.mxu0 %v39
    %95 = vmatprep.subr.mxu0 0.0
    %96 = vmatpush1.msra.mxu0 %v40
    %97 = vmatprep.subr.mxu0 0.0
    %98 = vmatpush1.msra.mxu0 %v41
    %99 = vmatprep.subr.mxu0 0.0
    %100 = vmatpush1.msra.mxu0 %v42
    %101 = vmatprep.subr.mxu0 0.0
    %102 = vmatpush1.msra.mxu0 %v43
    %103 = vmatprep.subr.mxu0 0.0
    %104 = vmatpush1.msra.mxu0 0.0
    %105 = vmatprep.subr.mxu0 0.0
    %106 = vmatpush1.msra.mxu0 0.0
    %107 = vmatprep.subr.mxu0 0.0
    %108 = vmatpush1.msra.mxu0 0.0
    %109 = vmatprep.subr.mxu0 0.0
    %110 = vmatpush1.msra.mxu0 0.0
    %111 = vmatprep.subr.mxu0 0.0
    %112 = vmatpush1.msra.mxu0 0.0
    %113 = vmatprep.subr.mxu0 0.0
    %114 = vmatpush1.msra.mxu0 0.0
    %115 = vmatprep.subr.mxu0 0.0
    %116 = vmatpush1.msra.mxu0 0.0
    %117 = vmatprep.subr.mxu0 0.0
    %118 = vmatpush1.msra.mxu0 0.0
    %119 = vmatprep.subr.mxu0 0.0
    %120 = vmatpush1.msra.mxu0 0.0
    %121 = vmatprep.subr.mxu0 0.0
    %122 = vmatpush1.msra.mxu0 0.0
    %123 = vmatprep.subr.mxu0 0.0
    %124 = vmatpush1.msra.mxu0 0.0
    %125 = vmatprep.subr.mxu0 0.0
    %126 = vmatpush1.msra.mxu0 0.0
    %127 = vmatprep.subr.mxu0 0.0
    %128 = vmatpush1.msra.mxu0 0.0
    %129 = vmatprep.subr.mxu0 0.0
    %130 = vmatpush1.msra.mxu0 0.0
    %131 = vmatprep.subr.mxu0 0.0
    %132 = vmatpush1.msra.mxu0 0.0
    %133 = vmatprep.subr.mxu0 0.0
    %134 = vmatpush1.msra.mxu0 0.0
    %135 = vmatprep.subr.mxu0 0.0
    %136 = vmatpush1.msra.mxu0 0.0
    %137 = vmatprep.subr.mxu0 0.0
    %138 = vmatpush1.msra.mxu0 0.0
    %139 = vmatprep.subr.mxu0 0.0
    %140 = vmatpush1.msra.mxu0 0.0
    %141 = vmatprep.subr.mxu0 0.0
    %142 = vmatpush1.msra.mxu0 0.0
    %143 = vmatprep.subr.mxu0 0.0
    %144 = vmatpush1.msra.mxu0 0.0
    %145 = vmatprep.subr.mxu0 0.0
    %146 = vmatpush1.msra.mxu0 0.0
    %147 = vmatprep.subr.mxu0 0.0
    %148 = vmatpush1.msra.mxu0 0.0
    %149 = vmatprep.subr.mxu0 0.0
    %150 = vmatpush1.msra.mxu0 0.0
    %151 = vmatprep.subr.mxu0 0.0
    %152 = vmatpush1.msra.mxu0 0.0
    %153 = vmatprep.subr.mxu0 0.0
    %154 = vmatpush1.msra.mxu0 0.0
    %155 = vmatprep.subr.mxu0 0.0
    %156 = vmatpush1.msra.mxu0 0.0
    %157 = vmatprep.mubr.f32.mxu0 0.0
    %158 = vmatmul.mubr.f32.gmra.mrb[0].mxu0 %v58
    %v159 = vpop.f32.mrb[0].mxu0
    %v160 = vadd.f32 0.0, %v159
    %v161 = vpop.f32.mrb[0].mxu0
    %162 = vmatprep.mubr.f32.mxu0 0.0
    %163 = vmatmul.mubr.f32.gmra.mrb[0].mxu0 %v61
    %v164 = vpop.f32.mrb[0].mxu0
    %v165 = vadd.f32 0.0, %v164
    %v166 = vpop.f32.mrb[0].mxu0
    %167 = vmatprep.mubr.f32.mxu0 0.0
    %168 = vmatmul.mubr.f32.gmra.mrb[0].mxu0 %v64
    %v169 = vpop.f32.mrb[0].mxu0
    %v170 = vadd.f32 0.0, %v169
    %v171 = vpop.f32.mrb[0].mxu0
    %172 = vmatprep.mubr.f32.mxu0 0.0
    %173 = vmatmul.mubr.f32.gmra.mrb[0].mxu0 %v67
    %v174 = vpop.f32.mrb[0].mxu0
    %v175 = vadd.f32 0.0, %v174
    %v176 = vpop.f32.mrb[0].mxu0
    %177 = vmatprep.mubr.f32.mxu0 0.0
    %178 = vmatmul.mubr.f32.gmra.mrb[0].mxu0 %v70
    %v179 = vpop.f32.mrb[0].mxu0
    %v180 = vadd.f32 0.0, %v179
    %v181 = vpop.f32.mrb[0].mxu0
    %182 = vmatprep.mubr.f32.mxu0 0.0
    %183 = vmatmul.mubr.f32.gmra.mrb[0].mxu0 %v73
    %v184 = vpop.f32.mrb[0].mxu0
    %v185 = vadd.f32 0.0, %v184
    %v186 = vpop.f32.mrb[0].mxu0
    %187 = vmatprep.mubr.f32.mxu0 0.0
    %188 = vmatmul.mubr.f32.gmra.mrb[0].mxu0 %v76
    %v189 = vpop.f32.mrb[0].mxu0
    %v190 = vadd.f32 0.0, %v189
    %v191 = vpop.f32.mrb[0].mxu0
    %192 = vmatprep.mubr.f32.mxu0 0.0
    %193 = vmatmul.mubr.f32.gmra.mrb[0].mxu0 %v79
    %v194 = vpop.f32.mrb[0].mxu0
    %v195 = vadd.f32 0.0, %v194
    %v196 = vpop.f32.mrb[0].mxu0
    %197 = vmatprep.mubr.f32.mxu0 0.0
    %198 = vmatmul.mubr.f32.gmra.mrb[0].mxu0 %v82
    %v199 = vpop.f32.mrb[0].mxu0
    %v200 = vadd.f32 0.0, %v199
    %v201 = vpop.f32.mrb[0].mxu0
    %202 = vmatprep.mubr.f32.mxu0 0.0
    %203 = vmatmul.mubr.f32.gmra.mrb[0].mxu0 %v85
    %v204 = vpop.f32.mrb[0].mxu0
    %v205 = vadd.f32 0.0, %v204
    %v206 = vpop.f32.mrb[0].mxu0
    %207 = vmatprep.mubr.f32.mxu0 0.0
    %208 = vmatmul.mubr.f32.gmra.mrb[0].mxu0 %v88
    %v209 = vpop.f32.mrb[0].mxu0
    %v210 = vadd.f32 0.0, %v209
    %v211 = vpop.f32.mrb[0].mxu0
    %212 = vmatprep.mubr.f32.mxu0 0.0
    %213 = vmatmul.mubr.f32.gmra.mrb[0].mxu0 %v91
    %v214 = vpop.f32.mrb[0].mxu0
    %v215 = vadd.f32 0.0, %v214
    %v216 = vpop.f32.mrb[0].mxu0
    %217 = vdwg.mxu0
    %v218 = vlaneseq
    %v219 = vshrl.u32 %v218, 7
    %v220 = vsub.s32 1, %v219
    %v221 = vrot.slane %v18, %v220
    %vm222 = vcmp.eq.s32.totalorder %v20, %v221
    %v223 = vsel %vm222, 1, 0
    %v224 = vcvt.s32.f32 %v223
    %v225 = vld [vmem:[%s2] sm:$0xff]
    %v226 = vld [vmem:[%s2 + $0x8] sm:$0xff]
    %v227 = vld [vmem:[%s2 + $0x10] sm:$0xff]
    %v228 = vld [vmem:[%s2 + $0x18] sm:$0xff]
    %v229 = vtanh.pop %v160
    %v230 = vtanh.pop %v165
    %v231 = vtanh.pop %v170
    %v232 = vtanh.pop %v175
    %v233 = vtanh.pop %v180
    %v234 = vtanh.pop %v185
    %v235 = vtanh.pop %v190
    %v236 = vtanh.pop %v195
    %v237 = vtanh.pop %v200
    %v238 = vtanh.pop %v205
    %v239 = vtanh.pop %v210
    %v240 = vtanh.pop %v215
    %v241 = vmul.f32 %v229, 0.5
    %v242 = vmul.f32 %v230, 0.5
    %v243 = vmul.f32 %v231, 0.5
    %v244 = vmul.f32 %v232, 0.5
    %v245 = vadd.f32 %v241, 0.5
    %v246 = vadd.f32 %v242, 0.5
    %v247 = vadd.f32 %v243, 0.5
    %v248 = vadd.f32 %v244, 0.5
    %v249 = vmul.f32 %v237, 0.5
    %v250 = vmul.f32 %v238, 0.5
    %v251 = vmul.f32 %v239, 0.5
    %v252 = vmul.f32 %v240, 0.5
    %v253 = vadd.f32 %v249, 0.5
    %v254 = vadd.f32 %v250, 0.5
    %v255 = vadd.f32 %v251, 0.5
    %v256 = vadd.f32 %v252, 0.5
    %v257 = vmul.f32 %v245, %v233
    %v258 = vmul.f32 %v246, %v234
    %v259 = vmul.f32 %v247, %v235
    %v260 = vmul.f32 %v248, %v236
    %v261 = vtanh.pop %v257
    %v262 = vtanh.pop %v258
    %v263 = vtanh.pop %v259
    %v264 = vtanh.pop %v260
    %v265 = vmul.f32 %v253, %v261
    %v266 = vmul.f32 %v254, %v262
    %v267 = vmul.f32 %v255, %v263
    %v268 = vmul.f32 %v256, %v264
    %v269 = vld [vmem:[%s3] sm:$0xff]
    %v270 = vld [vmem:[%s3 + $0x8] sm:$0xff]
    %v271 = vld [vmem:[%s3 + $0x10] sm:$0xff]
    %v272 = vld [vmem:[%s3 + $0x18] sm:$0xff]
    %vm273 = vcmask 261120
    %v275 = vsel %vm273, %v269, 0
    %v278 = vsel %vm273, %v270, 0
    %v281 = vsel %vm273, %v271, 0
    %v284 = vsel %vm273, %v272, 0
    %286 = vmatprep.subr.mxu0 0.0
    %287 = vmatpush1.msra.mxu0 %v265
    %288 = vmatprep.subr.mxu0 0.0
    %289 = vmatpush1.msra.mxu0 %v266
    %290 = vmatprep.subr.mxu0 0.0
    %291 = vmatpush1.msra.mxu0 %v267
    %292 = vmatprep.subr.mxu0 0.0
    %293 = vmatpush1.msra.mxu0 %v268
    %294 = vmatprep.subr.mxu0 0.0
    %295 = vmatpush1.msra.mxu0 0.0
    %296 = vmatprep.subr.mxu0 0.0
    %297 = vmatpush1.msra.mxu0 0.0
    %298 = vmatprep.subr.mxu0 0.0
    %299 = vmatpush1.msra.mxu0 0.0
    %300 = vmatprep.subr.mxu0 0.0
    %301 = vmatpush1.msra.mxu0 0.0
    %302 = vmatprep.subr.mxu0 0.0
    %303 = vmatpush1.msra.mxu0 0.0
    %304 = vmatprep.subr.mxu0 0.0
    %305 = vmatpush1.msra.mxu0 0.0
    %306 = vmatprep.subr.mxu0 0.0
    %307 = vmatpush1.msra.mxu0 0.0
    %308 = vmatprep.subr.mxu0 0.0
    %309 = vmatpush1.msra.mxu0 0.0
    %310 = vmatprep.subr.mxu0 0.0
    %311 = vmatpush1.msra.mxu0 0.0
    %312 = vmatprep.subr.mxu0 0.0
    %313 = vmatpush1.msra.mxu0 0.0
    %314 = vmatprep.subr.mxu0 0.0
    %315 = vmatpush1.msra.mxu0 0.0
    %316 = vmatprep.subr.mxu0 0.0
    %317 = vmatpush1.msra.mxu0 0.0
    %318 = vmatprep.subr.mxu0 0.0
    %319 = vmatpush1.msra.mxu0 0.0
    %320 = vmatprep.subr.mxu0 0.0
    %321 = vmatpush1.msra.mxu0 0.0
    %322 = vmatprep.subr.mxu0 0.0
    %323 = vmatpush1.msra.mxu0 0.0
    %324 = vmatprep.subr.mxu0 0.0
    %325 = vmatpush1.msra.mxu0 0.0
    %326 = vmatprep.subr.mxu0 0.0
    %327 = vmatpush1.msra.mxu0 0.0
    %328 = vmatprep.subr.mxu0 0.0
    %329 = vmatpush1.msra.mxu0 0.0
    %330 = vmatprep.subr.mxu0 0.0
    %331 = vmatpush1.msra.mxu0 0.0
    %332 = vmatprep.subr.mxu0 0.0
    %333 = vmatpush1.msra.mxu0 0.0
    %334 = vmatprep.subr.mxu0 0.0
    %335 = vmatpush1.msra.mxu0 0.0
    %336 = vmatprep.subr.mxu0 0.0
    %337 = vmatpush1.msra.mxu0 0.0
    %338 = vmatprep.subr.mxu0 0.0
    %339 = vmatpush1.msra.mxu0 0.0
    %340 = vmatprep.subr.mxu0 0.0
    %341 = vmatpush1.msra.mxu0 0.0
    %342 = vmatprep.subr.mxu0 0.0
    %343 = vmatpush1.msra.mxu0 0.0
    %344 = vmatprep.subr.mxu0 0.0
    %345 = vmatpush1.msra.mxu0 0.0
    %346 = vmatprep.subr.mxu0 0.0
    %347 = vmatpush1.msra.mxu0 0.0
    %348 = vmatprep.subr.mxu0 0.0
    %349 = vmatpush1.msra.mxu0 0.0
    %350 = vmatprep.mubr.f32.mxu0 0.0
    %351 = vmatmul.mubr.f32.gmra.mrb[0].mxu0 %v275
    %v352 = vpop.f32.mrb[0].mxu0
    %v353 = vadd.f32 0.0, %v352
    %v354 = vpop.f32.mrb[0].mxu0
    %355 = vmatprep.mubr.f32.mxu0 0.0
    %356 = vmatmul.mubr.f32.gmra.mrb[0].mxu0 %v278
    %v357 = vpop.f32.mrb[0].mxu0
    %v358 = vadd.f32 0.0, %v357
    %v359 = vpop.f32.mrb[0].mxu0
    %360 = vmatprep.mubr.f32.mxu0 0.0
    %361 = vmatmul.mubr.f32.gmra.mrb[0].mxu0 %v281
    %v362 = vpop.f32.mrb[0].mxu0
    %v363 = vadd.f32 0.0, %v362
    %v364 = vpop.f32.mrb[0].mxu0
    %365 = vmatprep.mubr.f32.mxu0 0.0
    %366 = vmatmul.mubr.f32.gmra.mrb[0].mxu0 %v284
    %v367 = vpop.f32.mrb[0].mxu0
    %v368 = vadd.f32 0.0, %v367
    %v369 = vpop.f32.mrb[0].mxu0
    %370 = vdwg.mxu0
    %vm371 = vcmask 64512
    %v373 = vsel %vm371, %v225, 0
    %v376 = vsel %vm371, %v226, 0
    %v379 = vsel %vm371, %v227, 0
    %v382 = vsel %vm371, %v228, 0
    %384 = vmatprep.subr.mxu0 0.0
    %385 = vmatpush1.msra.mxu0 %v224
    %386 = vmatprep.subr.mxu0 0.0
    %387 = vmatpush1.msra.mxu0 0.0
    %388 = vmatprep.subr.mxu0 0.0
    %389 = vmatpush1.msra.mxu0 0.0
    %390 = vmatprep.subr.mxu0 0.0
    %391 = vmatpush1.msra.mxu0 0.0
    %392 = vmatprep.subr.mxu0 0.0
    %393 = vmatpush1.msra.mxu0 0.0
    %394 = vmatprep.subr.mxu0 0.0
    %395 = vmatpush1.msra.mxu0 0.0
    %396 = vmatprep.subr.mxu0 0.0
    %397 = vmatpush1.msra.mxu0 0.0
    %398 = vmatprep.subr.mxu0 0.0
    %399 = vmatpush1.msra.mxu0 0.0
    %400 = vmatprep.subr.mxu0 0.0
    %401 = vmatpush1.msra.mxu0 0.0
    %402 = vmatprep.subr.mxu0 0.0
    %403 = vmatpush1.msra.mxu0 0.0
    %404 = vmatprep.subr.mxu0 0.0
    %405 = vmatpush1.msra.mxu0 0.0
    %406 = vmatprep.subr.mxu0 0.0
    %407 = vmatpush1.msra.mxu0 0.0
    %408 = vmatprep.subr.mxu0 0.0
    %409 = vmatpush1.msra.mxu0 0.0
    %410 = vmatprep.subr.mxu0 0.0
    %411 = vmatpush1.msra.mxu0 0.0
    %412 = vmatprep.subr.mxu0 0.0
    %413 = vmatpush1.msra.mxu0 0.0
    %414 = vmatprep.subr.mxu0 0.0
    %415 = vmatpush1.msra.mxu0 0.0
    %416 = vmatprep.subr.mxu0 0.0
    %417 = vmatpush1.msra.mxu0 0.0
    %418 = vmatprep.subr.mxu0 0.0
    %419 = vmatpush1.msra.mxu0 0.0
    %420 = vmatprep.subr.mxu0 0.0
    %421 = vmatpush1.msra.mxu0 0.0
    %422 = vmatprep.subr.mxu0 0.0
    %423 = vmatpush1.msra.mxu0 0.0
    %424 = vmatprep.subr.mxu0 0.0
    %425 = vmatpush1.msra.mxu0 0.0
    %426 = vmatprep.subr.mxu0 0.0
    %427 = vmatpush1.msra.mxu0 0.0
    %428 = vmatprep.subr.mxu0 0.0
    %429 = vmatpush1.msra.mxu0 0.0
    %430 = vmatprep.subr.mxu0 0.0
    %431 = vmatpush1.msra.mxu0 0.0
    %432 = vmatprep.subr.mxu0 0.0
    %433 = vmatpush1.msra.mxu0 0.0
    %434 = vmatprep.subr.mxu0 0.0
    %435 = vmatpush1.msra.mxu0 0.0
    %436 = vmatprep.subr.mxu0 0.0
    %437 = vmatpush1.msra.mxu0 0.0
    %438 = vmatprep.subr.mxu0 0.0
    %439 = vmatpush1.msra.mxu0 0.0
    %440 = vmatprep.subr.mxu0 0.0
    %441 = vmatpush1.msra.mxu0 0.0
    %442 = vmatprep.subr.mxu0 0.0
    %443 = vmatpush1.msra.mxu0 0.0
    %444 = vmatprep.subr.mxu0 0.0
    %445 = vmatpush1.msra.mxu0 0.0
    %446 = vmatprep.subr.mxu0 0.0
    %447 = vmatpush1.msra.mxu0 0.0
    %448 = vmatprep.mubr.f32.mxu0 0.0
    %449 = vmatmul.mubr.f32.gmra.mrb[0].mxu0 %v373
    %v450 = vpop.f32.mrb[0].mxu0
    %v451 = vadd.f32 %v353, %v450
    %v452 = vpop.f32.mrb[0].mxu0
    %453 = vmatprep.mubr.f32.mxu0 0.0
    %454 = vmatmul.mubr.f32.gmra.mrb[0].mxu0 %v376
    %v455 = vpop.f32.mrb[0].mxu0
    %v456 = vadd.f32 %v358, %v455
    %v457 = vpop.f32.mrb[0].mxu0
    %458 = vmatprep.mubr.f32.mxu0 0.0
    %459 = vmatmul.mubr.f32.gmra.mrb[0].mxu0 %v379
    %v460 = vpop.f32.mrb[0].mxu0
    %v461 = vadd.f32 %v363, %v460
    %v462 = vpop.f32.mrb[0].mxu0
    %463 = vmatprep.mubr.f32.mxu0 0.0
    %464 = vmatmul.mubr.f32.gmra.mrb[0].mxu0 %v382
    %v465 = vpop.f32.mrb[0].mxu0
    %v466 = vadd.f32 %v368, %v465
    %v467 = vpop.f32.mrb[0].mxu0
    %468 = vdwg.mxu0
    %v469 = vmax.f32 %v451, 0.0
    %v470 = vmax.f32 %v456, 0.0
    %v471 = vmax.f32 %v461, 0.0
    %v472 = vmax.f32 %v466, 0.0
    %473 = vst [vmem:[#allocation2] sm:$0xff] %v469
    %474 = vst [vmem:[#allocation2 + $0x8] sm:$0xff] %v470
    %475 = vst [vmem:[#allocation2 + $0x10] sm:$0xff] %v471
    %476 = vst [vmem:[#allocation2 + $0x18] sm:$0xff] %v472
    // Predicated region
    $region18: #{tpu_custom_call.1} parent=1 // pred_check
      _
    $region19: #{tpu_custom_call.1} parent=1 // pred_check_branch
      %478 = sbr.rel (0) target = $region21
    $region20: #{tpu_custom_call.1} parent=1 // pred_region
      %s480 = ssub.s32 512, 512
      %481 = vsyncadd [#allocation3], %s480
      %s482 = sshll.u32 [#allocation2], 4
      %s483 = int_to_ptr.vmem [resolvable:$true] %s482
      %488 = dma.vmem_to_hbm [thread:$0]  %s483, 512, %s4, [#allocation3], 128, 128, 8
    $region21: #{tpu_custom_call.1} parent=1 // pred_fallthru
      _
    // Predicated region
    $region22: #{tpu_custom_call.1} parent=1 // pred_check
      _
    $region23: #{tpu_custom_call.1} parent=1 // pred_check_branch
      %490 = sbr.rel (0) target = $region25
    $region24: #{tpu_custom_call.1} parent=1 // pred_region
      %491 = dma.done [#allocation3], 512
    $region25: #{tpu_custom_call.1} parent=1 // pred_fallthru
      _
    %492 = vsyncpa [#allocation3], 1

</llo_original>
